<compile_context>
chip_gen: v7x
topology: tpu7x:2x2x1
jax: 0.10.0
libtpu: 0.0.40
codegen_flags: <defaults>
</compile_context>

<pallas_src>
import functools

import jax
import jax.numpy as jnp
from jax import lax
from jax.experimental import pallas as pl
from jax.experimental.pallas import tpu as pltpu


def _dwsep_kernel(x_ref, wdw_ref, wpw_ref, bias_ref, o_ref,
                  *, Nb, C, O, K, OH, OW, stride, dilation, use_mxu):
    P = OH * OW

    # Hoisted casts (no-ops for f32 inputs, avoids per-tap converts for bf16).
    wdw = wdw_ref[...].astype(jnp.float32)      # (C, K, K)
    wpw = wpw_ref[...].astype(jnp.float32)      # (O, C)
    bias = bias_ref[...].astype(jnp.float32)    # (O, P)  (depthwise bias folded in)

    if not use_mxu:
        # Hoist the per-input-channel pointwise columns out of the image loop.
        w_cols = [wpw[:, c:c + 1] for c in range(C)]        # each (O, 1)

    for n in range(Nb):                 # static unroll over images in this block
        x = x_ref[n].astype(jnp.float32)                    # (C, Hp, Wp)

        # ---------------- depthwise KxK conv (VPU) ----------------
        if stride == 1:
            # K lane-offset slices total (one per kw); kh taps then only need
            # sublane-offset row slices of these hoisted copies.
            x_w = [x[:, :, kw * dilation: kw * dilation + OW] for kw in range(K)]
            acc = None
            for kh in range(K):
                h0 = kh * dilation
                for kw in range(K):
                    patch = x_w[kw][:, h0:h0 + OH, :]                 # (C, OH, OW)
                    term = patch * wdw[:, kh:kh + 1, kw:kw + 1]
                    acc = term if acc is None else acc + term
        else:
            # General strided fallback (per-tap strided slices).
            acc = None
            for kh in range(K):
                for kw in range(K):
                    h0 = kh * dilation
                    w0 = kw * dilation
                    patch = x[:, h0:h0 + (OH - 1) * stride + 1:stride,
                                 w0:w0 + (OW - 1) * stride + 1:stride]
                    term = patch * wdw[:, kh:kh + 1, kw:kw + 1]
                    acc = term if acc is None else acc + term

        dw_flat = acc.reshape(C, P)                         # (C, OH*OW), lane-dense

        # ---------------- pointwise 1x1 conv ----------------
        if use_mxu:
            pw = bias + jnp.dot(wpw, dw_flat, preferred_element_type=jnp.float32)
        else:
            # Contraction depth C is tiny: C broadcast-FMAs on the VPU instead of
            # a degenerate MXU matmul.
            pw = bias
            for c in range(C):
                pw = pw + w_cols[c] * dw_flat[c:c + 1, :]   # (O,1)*(1,P) -> (O,P)

        # Full-width (lane-dense) store.
        o_ref[n] = pw.astype(o_ref.dtype)                   # (O, OH*OW)


def depthwise_conv2d(x, w_dw, b_dw, w_pw, b_pw, *, stride=1, padding=0,
                     dilation=1, batch_block=None):
    """x: (N, C, H, W); w_dw: (C, 1, K, K); b_dw: (C,); w_pw: (O, C, 1, 1); b_pw: (O,)."""
    N, C, H, W = x.shape
    K = w_dw.shape[-1]
    O = w_pw.shape[0]

    OH = (H + 2 * padding - dilation * (K - 1) - 1) // stride + 1
    OW = (W + 2 * padding - dilation * (K - 1) - 1) // stride + 1
    P = OH * OW

    if batch_block is None:
        # Keep >= 2 grid steps when possible: a "parallel" batch axis can then use
        # both TensorCores on v7x, while still amortizing per-step overhead.
        batch_block = N // 2 if (N >= 2 and N % 2 == 0) else 1
    Nb = batch_block
    assert N % Nb == 0, (N, Nb)
    grid = (N // Nb,)

    # PyTorch `padding` semantics (both sides), done once in plain JAX.
    x_pad = jnp.pad(x, ((0, 0), (0, 0), (padding, padding), (padding, padding)))
    Hp, Wp = x_pad.shape[-2:]

    wdw = w_dw.reshape(C, K, K)
    wpw = w_pw.reshape(O, C)

    # Pointwise conv is linear => fold the depthwise bias into the pointwise bias.
    b_eff = (wpw.astype(jnp.float32) @ b_dw.astype(jnp.float32)
             + b_pw.astype(jnp.float32))                     # (O,)
    # Lane-dense bias block; constant index_map means it is only fetched once.
    bias = jnp.broadcast_to(b_eff[:, None], (O, P))

    use_mxu = C >= 128   # contraction depth too shallow for the MXU otherwise

    kernel = functools.partial(_dwsep_kernel, Nb=Nb, C=C, O=O, K=K, OH=OH, OW=OW,
                               stride=stride, dilation=dilation, use_mxu=use_mxu)

    out_flat = pl.pallas_call(
        kernel,
        out_shape=jax.ShapeDtypeStruct((N, O, P), x.dtype),
        grid_spec=pltpu.PrefetchScalarGridSpec(
            num_scalar_prefetch=0,
            grid=grid,
            in_specs=[
                pl.BlockSpec((Nb, C, Hp, Wp), lambda n: (n, 0, 0, 0)),
                pl.BlockSpec((C, K, K), lambda n: (0, 0, 0)),
                pl.BlockSpec((O, C), lambda n: (0, 0)),
                pl.BlockSpec((O, P), lambda n: (0, 0)),
            ],
            out_specs=pl.BlockSpec((Nb, O, P), lambda n: (n, 0, 0)),
        ),
        compiler_params=pltpu.CompilerParams(
            dimension_semantics=("parallel",)),
    )(x_pad, wdw, wpw, bias)

    # Un-flatten the lane-dense spatial axis back to NCHW outside the kernel.
    return out_flat.reshape(N, O, OH, OW)


def _reference(x, w_dw, b_dw, w_pw, b_pw, *, stride, padding, dilation):
    C = x.shape[1]
    dw = lax.conv_general_dilated(
        x, w_dw, window_strides=(stride, stride),
        padding=[(padding, padding), (padding, padding)],
        rhs_dilation=(dilation, dilation),
        dimension_numbers=("NCHW", "OIHW", "NCHW"),
        feature_group_count=C)
    dw = dw + b_dw.reshape(1, -1, 1, 1)
    pw = lax.conv_general_dilated(
        dw, w_pw, window_strides=(1, 1), padding="VALID",
        dimension_numbers=("NCHW", "OIHW", "NCHW"))
    return pw + b_pw.reshape(1, -1, 1, 1)


if __name__ == "__main__":
    # Module config: DepthwiseConv2d(in_channels=4, out_channels=8, kernel_size=3,
    #                                stride=1, padding=1, bias=True, conv_type='default')
    N, C, H, W = 2, 4, 16, 16
    O, K = 8, 3
    stride, padding, dilation = 1, 1, 1

    key = jax.random.PRNGKey(0)
    kx, k1, k2, k3, k4 = jax.random.split(key, 5)

    x = jax.random.normal(kx, (N, C, H, W), jnp.float32)

    # Deterministic kaiming_normal_(mode='fan_out', nonlinearity='relu') style init.
    fan_out_dw = 1 * K * K  # out_channels/groups * kh * kw (depthwise: groups == C)
    w_dw = jax.random.normal(k1, (C, 1, K, K), jnp.float32) * jnp.sqrt(2.0 / fan_out_dw)
    b_dw = jax.random.normal(k2, (C,), jnp.float32) * 0.1

    fan_out_pw = O * 1 * 1
    w_pw = jax.random.normal(k3, (O, C, 1, 1), jnp.float32) * jnp.sqrt(2.0 / fan_out_pw)
    b_pw = jax.random.normal(k4, (O,), jnp.float32) * 0.1

    out = depthwise_conv2d(x, w_dw, b_dw, w_pw, b_pw,
                           stride=stride, padding=padding, dilation=dilation)
    out = jax.block_until_ready(out)

    ref = _reference(x, w_dw, b_dw, w_pw, b_pw,
                     stride=stride, padding=padding, dilation=dilation)
    ref = jax.block_until_ready(ref)

    assert out.shape == ref.shape, (out.shape, ref.shape)
    assert jnp.allclose(out, ref, atol=1e-4, rtol=1e-4), \
        float(jnp.max(jnp.abs(out - ref)))

    print("KERNEL_OK")
</pallas_src>

<mosaic_0001>
module attributes {stable_mosaic.version = 11 : i64} {
  func.func @_dwsep_kernel(%arg0: i32, %arg1: memref<1x4x18x18xf32, #tpu.memory_space<vmem>>, %arg2: memref<4x3x3xf32, #tpu.memory_space<vmem>>, %arg3: memref<8x4xf32, #tpu.memory_space<vmem>>, %arg4: memref<8x256xf32, #tpu.memory_space<vmem>>, %arg5: memref<1x8x256xf32, #tpu.memory_space<vmem>>) attributes {dimension_semantics = [#tpu.dimension_semantics<parallel>], iteration_bounds = array<i64: 2>, scalar_prefetch = 0 : i64, scratch_operands = 0 : i64, tpu.core_type = #tpu.core_type<tc>, window_params = [{transform_indices = @transform_0, window_bounds = array<i64: 1, 4, 18, 18>}, {pipeline_mode = #tpu.pipeline_mode<synchronous>, transform_indices = @transform_1, window_bounds = array<i64: 4, 3, 3>}, {pipeline_mode = #tpu.pipeline_mode<synchronous>, transform_indices = @transform_2, window_bounds = array<i64: 8, 4>}, {pipeline_mode = #tpu.pipeline_mode<synchronous>, transform_indices = @transform_3, window_bounds = array<i64: 8, 256>}, {transform_indices = @transform_4, window_bounds = array<i64: 1, 8, 256>}]} {
    %c0 = arith.constant 0 : index
    %c0_0 = arith.constant 0 : index
    %c0_1 = arith.constant 0 : index
    %0 = vector.load %arg2[%c0, %c0_0, %c0_1] : memref<4x3x3xf32, #tpu.memory_space<vmem>>, vector<4x3x3xf32>
    %c0_2 = arith.constant 0 : index
    %c0_3 = arith.constant 0 : index
    %1 = vector.load %arg3[%c0_2, %c0_3] : memref<8x4xf32, #tpu.memory_space<vmem>>, vector<8x4xf32>
    %c0_4 = arith.constant 0 : index
    %c0_5 = arith.constant 0 : index
    %2 = vector.load %arg4[%c0_4, %c0_5] : memref<8x256xf32, #tpu.memory_space<vmem>>, vector<8x256xf32>
    %3 = vector.extract_strided_slice %1 {offsets = [0, 0], sizes = [8, 1], strides = [1, 1]} : vector<8x4xf32> to vector<8x1xf32>
    %4 = vector.extract_strided_slice %1 {offsets = [0, 1], sizes = [8, 1], strides = [1, 1]} : vector<8x4xf32> to vector<8x1xf32>
    %5 = vector.extract_strided_slice %1 {offsets = [0, 2], sizes = [8, 1], strides = [1, 1]} : vector<8x4xf32> to vector<8x1xf32>
    %6 = vector.extract_strided_slice %1 {offsets = [0, 3], sizes = [8, 1], strides = [1, 1]} : vector<8x4xf32> to vector<8x1xf32>
    %c0_6 = arith.constant 0 : index
    %c0_7 = arith.constant 0 : index
    %c0_8 = arith.constant 0 : index
    %c0_9 = arith.constant 0 : index
    %7 = vector.load %arg1[%c0_6, %c0_7, %c0_8, %c0_9] : memref<1x4x18x18xf32, #tpu.memory_space<vmem>>, vector<1x4x18x18xf32>
    %8 = vector.shape_cast %7 : vector<1x4x18x18xf32> to vector<4x18x18xf32>
    %9 = vector.extract_strided_slice %8 {offsets = [0, 0, 0], sizes = [4, 18, 16], strides = [1, 1, 1]} : vector<4x18x18xf32> to vector<4x18x16xf32>
    %10 = vector.extract_strided_slice %8 {offsets = [0, 0, 1], sizes = [4, 18, 16], strides = [1, 1, 1]} : vector<4x18x18xf32> to vector<4x18x16xf32>
    %11 = vector.extract_strided_slice %8 {offsets = [0, 0, 2], sizes = [4, 18, 16], strides = [1, 1, 1]} : vector<4x18x18xf32> to vector<4x18x16xf32>
    %12 = vector.extract_strided_slice %9 {offsets = [0, 0, 0], sizes = [4, 16, 16], strides = [1, 1, 1]} : vector<4x18x16xf32> to vector<4x16x16xf32>
    %13 = vector.extract_strided_slice %0 {offsets = [0, 0, 0], sizes = [4, 1, 1], strides = [1, 1, 1]} : vector<4x3x3xf32> to vector<4x1x1xf32>
    %14 = vector.broadcast %13 : vector<4x1x1xf32> to vector<4x16x16xf32>
    %15 = arith.mulf %12, %14 : vector<4x16x16xf32>
    %16 = vector.extract_strided_slice %10 {offsets = [0, 0, 0], sizes = [4, 16, 16], strides = [1, 1, 1]} : vector<4x18x16xf32> to vector<4x16x16xf32>
    %17 = vector.extract_strided_slice %0 {offsets = [0, 0, 1], sizes = [4, 1, 1], strides = [1, 1, 1]} : vector<4x3x3xf32> to vector<4x1x1xf32>
    %18 = vector.broadcast %17 : vector<4x1x1xf32> to vector<4x16x16xf32>
    %19 = arith.mulf %16, %18 : vector<4x16x16xf32>
    %20 = arith.addf %15, %19 : vector<4x16x16xf32>
    %21 = vector.extract_strided_slice %11 {offsets = [0, 0, 0], sizes = [4, 16, 16], strides = [1, 1, 1]} : vector<4x18x16xf32> to vector<4x16x16xf32>
    %22 = vector.extract_strided_slice %0 {offsets = [0, 0, 2], sizes = [4, 1, 1], strides = [1, 1, 1]} : vector<4x3x3xf32> to vector<4x1x1xf32>
    %23 = vector.broadcast %22 : vector<4x1x1xf32> to vector<4x16x16xf32>
    %24 = arith.mulf %21, %23 : vector<4x16x16xf32>
    %25 = arith.addf %20, %24 : vector<4x16x16xf32>
    %26 = vector.extract_strided_slice %9 {offsets = [0, 1, 0], sizes = [4, 16, 16], strides = [1, 1, 1]} : vector<4x18x16xf32> to vector<4x16x16xf32>
    %27 = vector.extract_strided_slice %0 {offsets = [0, 1, 0], sizes = [4, 1, 1], strides = [1, 1, 1]} : vector<4x3x3xf32> to vector<4x1x1xf32>
    %28 = vector.broadcast %27 : vector<4x1x1xf32> to vector<4x16x16xf32>
    %29 = arith.mulf %26, %28 : vector<4x16x16xf32>
    %30 = arith.addf %25, %29 : vector<4x16x16xf32>
    %31 = vector.extract_strided_slice %10 {offsets = [0, 1, 0], sizes = [4, 16, 16], strides = [1, 1, 1]} : vector<4x18x16xf32> to vector<4x16x16xf32>
    %32 = vector.extract_strided_slice %0 {offsets = [0, 1, 1], sizes = [4, 1, 1], strides = [1, 1, 1]} : vector<4x3x3xf32> to vector<4x1x1xf32>
    %33 = vector.broadcast %32 : vector<4x1x1xf32> to vector<4x16x16xf32>
    %34 = arith.mulf %31, %33 : vector<4x16x16xf32>
    %35 = arith.addf %30, %34 : vector<4x16x16xf32>
    %36 = vector.extract_strided_slice %11 {offsets = [0, 1, 0], sizes = [4, 16, 16], strides = [1, 1, 1]} : vector<4x18x16xf32> to vector<4x16x16xf32>
    %37 = vector.extract_strided_slice %0 {offsets = [0, 1, 2], sizes = [4, 1, 1], strides = [1, 1, 1]} : vector<4x3x3xf32> to vector<4x1x1xf32>
    %38 = vector.broadcast %37 : vector<4x1x1xf32> to vector<4x16x16xf32>
    %39 = arith.mulf %36, %38 : vector<4x16x16xf32>
    %40 = arith.addf %35, %39 : vector<4x16x16xf32>
    %41 = vector.extract_strided_slice %9 {offsets = [0, 2, 0], sizes = [4, 16, 16], strides = [1, 1, 1]} : vector<4x18x16xf32> to vector<4x16x16xf32>
    %42 = vector.extract_strided_slice %0 {offsets = [0, 2, 0], sizes = [4, 1, 1], strides = [1, 1, 1]} : vector<4x3x3xf32> to vector<4x1x1xf32>
    %43 = vector.broadcast %42 : vector<4x1x1xf32> to vector<4x16x16xf32>
    %44 = arith.mulf %41, %43 : vector<4x16x16xf32>
    %45 = arith.addf %40, %44 : vector<4x16x16xf32>
    %46 = vector.extract_strided_slice %10 {offsets = [0, 2, 0], sizes = [4, 16, 16], strides = [1, 1, 1]} : vector<4x18x16xf32> to vector<4x16x16xf32>
    %47 = vector.extract_strided_slice %0 {offsets = [0, 2, 1], sizes = [4, 1, 1], strides = [1, 1, 1]} : vector<4x3x3xf32> to vector<4x1x1xf32>
    %48 = vector.broadcast %47 : vector<4x1x1xf32> to vector<4x16x16xf32>
    %49 = arith.mulf %46, %48 : vector<4x16x16xf32>
    %50 = arith.addf %45, %49 : vector<4x16x16xf32>
    %51 = vector.extract_strided_slice %11 {offsets = [0, 2, 0], sizes = [4, 16, 16], strides = [1, 1, 1]} : vector<4x18x16xf32> to vector<4x16x16xf32>
    %52 = vector.extract_strided_slice %0 {offsets = [0, 2, 2], sizes = [4, 1, 1], strides = [1, 1, 1]} : vector<4x3x3xf32> to vector<4x1x1xf32>
    %53 = vector.broadcast %52 : vector<4x1x1xf32> to vector<4x16x16xf32>
    %54 = arith.mulf %51, %53 : vector<4x16x16xf32>
    %55 = arith.addf %50, %54 : vector<4x16x16xf32>
    %56 = vector.shape_cast %55 : vector<4x16x16xf32> to vector<4x256xf32>
    %57 = vector.extract_strided_slice %56 {offsets = [0, 0], sizes = [1, 256], strides = [1, 1]} : vector<4x256xf32> to vector<1x256xf32>
    %58 = vector.broadcast %3 : vector<8x1xf32> to vector<8x256xf32>
    %59 = vector.broadcast %57 : vector<1x256xf32> to vector<8x256xf32>
    %60 = arith.mulf %58, %59 : vector<8x256xf32>
    %61 = arith.addf %2, %60 : vector<8x256xf32>
    %62 = vector.extract_strided_slice %56 {offsets = [1, 0], sizes = [1, 256], strides = [1, 1]} : vector<4x256xf32> to vector<1x256xf32>
    %63 = vector.broadcast %4 : vector<8x1xf32> to vector<8x256xf32>
    %64 = vector.broadcast %62 : vector<1x256xf32> to vector<8x256xf32>
    %65 = arith.mulf %63, %64 : vector<8x256xf32>
    %66 = arith.addf %61, %65 : vector<8x256xf32>
    %67 = vector.extract_strided_slice %56 {offsets = [2, 0], sizes = [1, 256], strides = [1, 1]} : vector<4x256xf32> to vector<1x256xf32>
    %68 = vector.broadcast %5 : vector<8x1xf32> to vector<8x256xf32>
    %69 = vector.broadcast %67 : vector<1x256xf32> to vector<8x256xf32>
    %70 = arith.mulf %68, %69 : vector<8x256xf32>
    %71 = arith.addf %66, %70 : vector<8x256xf32>
    %72 = vector.extract_strided_slice %56 {offsets = [3, 0], sizes = [1, 256], strides = [1, 1]} : vector<4x256xf32> to vector<1x256xf32>
    %73 = vector.broadcast %6 : vector<8x1xf32> to vector<8x256xf32>
    %74 = vector.broadcast %72 : vector<1x256xf32> to vector<8x256xf32>
    %75 = arith.mulf %73, %74 : vector<8x256xf32>
    %76 = arith.addf %71, %75 : vector<8x256xf32>
    %c0_10 = arith.constant 0 : index
    %c0_11 = arith.constant 0 : index
    %c0_12 = arith.constant 0 : index
    %77 = vector.load %arg5[%c0_10, %c0_11, %c0_12] : memref<1x8x256xf32, #tpu.memory_space<vmem>>, vector<1x8x256xf32>
    %78 = vector.shape_cast %77 : vector<1x8x256xf32> to vector<8x256xf32>
    %79 = vector.shape_cast %76 : vector<8x256xf32> to vector<1x8x256xf32>
    tpu.vector_store %arg5[%c0_10, %c0_11, %c0_12], %79 {strides = array<i32>} : memref<1x8x256xf32, #tpu.memory_space<vmem>>, vector<1x8x256xf32>,
    return
  }
  func.func @transform_0(%arg0: i32) -> (i32, i32, i32, i32) {
    %c0_i32 = arith.constant 0 : i32
    %c0_i32_0 = arith.constant 0 : i32
    %c0_i32_1 = arith.constant 0 : i32
    %c0_i32_2 = arith.constant 0 : i32
    return %arg0, %c0_i32, %c0_i32_0, %c0_i32_1 : i32, i32, i32, i32
  }
  func.func @transform_1(%arg0: i32) -> (i32, i32, i32) {
    %c0_i32 = arith.constant 0 : i32
    %c0_i32_0 = arith.constant 0 : i32
    %c0_i32_1 = arith.constant 0 : i32
    %c0_i32_2 = arith.constant 0 : i32
    return %c0_i32, %c0_i32_0, %c0_i32_1 : i32, i32, i32
  }
  func.func @transform_2(%arg0: i32) -> (i32, i32) {
    %c0_i32 = arith.constant 0 : i32
    %c0_i32_0 = arith.constant 0 : i32
    %c0_i32_1 = arith.constant 0 : i32
    return %c0_i32, %c0_i32_0 : i32, i32
  }
  func.func @transform_3(%arg0: i32) -> (i32, i32) {
    %c0_i32 = arith.constant 0 : i32
    %c0_i32_0 = arith.constant 0 : i32
    %c0_i32_1 = arith.constant 0 : i32
    return %c0_i32, %c0_i32_0 : i32, i32
  }
  func.func @transform_4(%arg0: i32) -> (i32, i32, i32) {
    %c0_i32 = arith.constant 0 : i32
    %c0_i32_0 = arith.constant 0 : i32
    %c0_i32_1 = arith.constant 0 : i32
    return %arg0, %c0_i32, %c0_i32_0 : i32, i32, i32
  }
}

</mosaic_0001>

<llo_original>
// kernel: tpu_custom_call.1
$region0: #{tpu_custom_call.1}
  #allocation0 [shape = 'u32[]', space=smem, size = 0x4, offset = 0x4, fixed_abs, tag = 'smem constant byte address 0x4 - core index']
  #allocation1 [shape = 'u32[144,128]{1,0:T(1,128)}', space=vmem, size = 0x12000, scoped, tag = 'internal scratch']
  %s0 = inlined_call_operand.vmem [shape: f32[2,4,18,18], index: 0, kind: input, shape index: {}]
  %s1 = inlined_call_operand.vmem [shape: f32[4,3,3], index: 1, kind: input, shape index: {}]
  %s2 = inlined_call_operand.vmem [shape: f32[8,4], index: 2, kind: input, shape index: {}]
  %s3 = inlined_call_operand.vmem [shape: f32[8,256], index: 3, kind: input, shape index: {}]
  %s4 = inlined_call_operand.hbm [shape: f32[2,8,256], index: 4, kind: output, shape index: {}]
  %s5 = sld [smem:[#allocation0]]
  $region49: #{tpu_custom_call.1} parent=0
    _
  %s7 = ssub.s32 1, %s5
  %s8 = scalar_select 0, %s7, %s5
  $region1: #{tpu_custom_call.1} parent=0
    #allocation2 [shape = 'u8[16384]{0}', space=vmem, size = 0x4000, scoped, tag = 'output window, operand 0']
    #allocation3 [shape = 's32[2]{0}', space=sflag, size = 0x8, scoped, tag = 'scoped memory for tpu_custom_call.1']
    %9 = vsyncpa [#allocation3], 0
    %s10 = scalar_lea.sflag [#allocation3], 1
    %11 = vsyncpa %s10, 0
    loop: start=0, step=1, limit=4
    $region2: #{tpu_custom_call.1} parent=1 // loop_pre_header
      _
    $region3: #{tpu_custom_call.1} parent=1 // loop_header
      %s13 = sphi 0, %s17
      %p14 = scmp.ge.s32.totalorder %s13, 4
      %s23 = sphi 0, %s25
      %s26 = sphi 0, %s23
      %s27 = sphi 0, %s26
      %s43 = sphi 0, %s27
      %s47 = sphi 0, %s47
      %s49 = sphi 0, %s47
      %s50 = sphi 0, %s49
      %s64 = sphi 0, %s50
      %s68 = sphi 0, %s68
      %s70 = sphi 0, %s68
      %s71 = sphi 0, %s70
      %s85 = sphi 0, %s71
      %s89 = sphi 0, %s89
      %s91 = sphi 0, %s89
      %s92 = sphi 0, %s91
      %s106 = sphi 0, %s92
      %s112 = sphi 0, %s114
      %s115 = sphi 0, %s112
      %s116 = sphi 0, %s115
      %s132 = sphi 0, %s116
    $region4: #{tpu_custom_call.1} parent=1 // loop_header_branch
      %16 = sbr.rel (%p14) target = $region8
    $region5: #{tpu_custom_call.1} parent=1 // loop_body
      %s18 = ssub.s32 %s13, 1
      %s19 = ssub.s32 %s13, 2
      %s20 = sadd.s32 %s13, 1
      %s21 = ssub.s32 %s13, %s20
      %p22 = scmp.eq.s32.totalorder %s21, 0
      %s24 = sadd.s32 %s23, 1
      %s25 = scalar_select %p22, %s23, %s24
      %p28 = pneg %p22
      %p29 = scmp.eq.s32.totalorder %s13, 1
      %p30 = por %p28, %p29
      %p31 = scmp.ne.s32.totalorder %s23, %s26
      %p32 = scmp.eq.s32.totalorder %s13, 0
      %p33 = por %p31, %p32
      %p34 = scmp.ne.s32.totalorder %s23, %s26
      %p35 = scmp.eq.s32.totalorder %s18, 1
      %p36 = por %p34, %p35
      %p37 = scmp.ne.s32.totalorder %s26, %s27
      %p38 = scmp.eq.s32.totalorder %s18, 0
      %p39 = por %p37, %p38
      %p40 = scmp.ne.s32.totalorder %s26, %s27
      %p41 = scmp.eq.s32.totalorder %s19, 1
      %p42 = por %p40, %p41
      %p44 = scmp.ne.s32.totalorder %s27, %s43
      %p45 = scmp.eq.s32.totalorder %s19, 0
      %p46 = por %p44, %p45
      %s48 = sadd.s32 %s47, 1
      %p51 = scmp.eq.s32.totalorder %s13, 1
      %p52 = scmp.ne.s32.totalorder %s47, %s49
      %p53 = scmp.eq.s32.totalorder %s13, 0
      %p54 = por %p52, %p53
      %p55 = scmp.ne.s32.totalorder %s47, %s49
      %p56 = scmp.eq.s32.totalorder %s18, 1
      %p57 = por %p55, %p56
      %p58 = scmp.ne.s32.totalorder %s49, %s50
      %p59 = scmp.eq.s32.totalorder %s18, 0
      %p60 = por %p58, %p59
      %p61 = scmp.ne.s32.totalorder %s49, %s50
      %p62 = scmp.eq.s32.totalorder %s19, 1
      %p63 = por %p61, %p62
      %p65 = scmp.ne.s32.totalorder %s50, %s64
      %p66 = scmp.eq.s32.totalorder %s19, 0
      %p67 = por %p65, %p66
      %s69 = sadd.s32 %s68, 1
      %p72 = scmp.eq.s32.totalorder %s13, 1
      %p73 = scmp.ne.s32.totalorder %s68, %s70
      %p74 = scmp.eq.s32.totalorder %s13, 0
      %p75 = por %p73, %p74
      %p76 = scmp.ne.s32.totalorder %s68, %s70
      %p77 = scmp.eq.s32.totalorder %s18, 1
      %p78 = por %p76, %p77
      %p79 = scmp.ne.s32.totalorder %s70, %s71
      %p80 = scmp.eq.s32.totalorder %s18, 0
      %p81 = por %p79, %p80
      %p82 = scmp.ne.s32.totalorder %s70, %s71
      %p83 = scmp.eq.s32.totalorder %s19, 1
      %p84 = por %p82, %p83
      %p86 = scmp.ne.s32.totalorder %s71, %s85
      %p87 = scmp.eq.s32.totalorder %s19, 0
      %p88 = por %p86, %p87
      %s90 = sadd.s32 %s89, 1
      %p93 = scmp.eq.s32.totalorder %s13, 1
      %p94 = scmp.ne.s32.totalorder %s89, %s91
      %p95 = scmp.eq.s32.totalorder %s13, 0
      %p96 = por %p94, %p95
      %p97 = scmp.ne.s32.totalorder %s89, %s91
      %p98 = scmp.eq.s32.totalorder %s18, 1
      %p99 = por %p97, %p98
      %p100 = scmp.ne.s32.totalorder %s91, %s92
      %p101 = scmp.eq.s32.totalorder %s18, 0
      %p102 = por %p100, %p101
      %p103 = scmp.ne.s32.totalorder %s91, %s92
      %p104 = scmp.eq.s32.totalorder %s19, 1
      %p105 = por %p103, %p104
      %p107 = scmp.ne.s32.totalorder %s92, %s106
      %p108 = scmp.eq.s32.totalorder %s19, 0
      %p109 = por %p107, %p108
      %s110 = ssub.s32 %s13, %s20
      %p111 = scmp.eq.s32.totalorder %s110, 0
      %s113 = sadd.s32 %s112, 1
      %s114 = scalar_select %p111, %s112, %s113
      %p117 = pneg %p111
      %p118 = scmp.eq.s32.totalorder %s13, 1
      %p119 = por %p117, %p118
      %p120 = scmp.ne.s32.totalorder %s112, %s115
      %p121 = scmp.eq.s32.totalorder %s13, 0
      %p122 = por %p120, %p121
      %p123 = scmp.ne.s32.totalorder %s112, %s115
      %p124 = scmp.eq.s32.totalorder %s18, 1
      %p125 = por %p123, %p124
      %p126 = scmp.ne.s32.totalorder %s115, %s116
      %p127 = scmp.eq.s32.totalorder %s18, 0
      %p128 = por %p126, %p127
      %p129 = scmp.ne.s32.totalorder %s115, %s116
      %p130 = scmp.eq.s32.totalorder %s19, 1
      %p131 = por %p129, %p130
      %p133 = scmp.ne.s32.totalorder %s116, %s132
      %p134 = scmp.eq.s32.totalorder %s19, 0
      %p135 = por %p133, %p134
      %p136 = scmp.le.s32.totalorder 1, %s13
      %p137 = scmp.lt.s32.totalorder %s13, 3
      %p138 = pnand %p136, %p137
      %p139 = pneg %p138
      // Predicated region
      $region9: #{tpu_custom_call.1} parent=5 // pred_check
        _
      $region10: #{tpu_custom_call.1} parent=5 // pred_check_branch
        %141 = sbr.rel (%p138) target = $region12
      $region11: #{tpu_custom_call.1} parent=5 // pred_region
        %s142 = ssub.s32 %s13, 1
        // Predicated region
        $region13: #{tpu_custom_call.1} parent=11 // pred_check
          %p143 = pneg %p60
        $region14: #{tpu_custom_call.1} parent=11 // pred_check_branch
          %145 = sbr.rel (%p143) target = $region16
        $region15: #{tpu_custom_call.1} parent=11 // pred_region
          _
        $region16: #{tpu_custom_call.1} parent=11 // pred_fallthru
          _
        // Predicated region
        $region17: #{tpu_custom_call.1} parent=11 // pred_check
          %p146 = pneg %p81
        $region18: #{tpu_custom_call.1} parent=11 // pred_check_branch
          %148 = sbr.rel (%p146) target = $region20
        $region19: #{tpu_custom_call.1} parent=11 // pred_region
          _
        $region20: #{tpu_custom_call.1} parent=11 // pred_fallthru
          _
        // Predicated region
        $region21: #{tpu_custom_call.1} parent=11 // pred_check
          %p149 = pneg %p102
        $region22: #{tpu_custom_call.1} parent=11 // pred_check_branch
          %151 = sbr.rel (%p149) target = $region24
        $region23: #{tpu_custom_call.1} parent=11 // pred_region
          _
        $region24: #{tpu_custom_call.1} parent=11 // pred_fallthru
          _
      $region12: #{tpu_custom_call.1} parent=5 // pred_fallthru
        _
      %p152 = scmp.lt.s32.totalorder %s13, 2
      // Predicated region
      $region25: #{tpu_custom_call.1} parent=5 // pred_check
        %p153 = pneg %p152
      $region26: #{tpu_custom_call.1} parent=5 // pred_check_branch
        %155 = sbr.rel (%p153) target = $region28
      $region27: #{tpu_custom_call.1} parent=5 // pred_region
        // Predicated region
        $region29: #{tpu_custom_call.1} parent=27 // pred_check
          %p156 = pneg %p33
        $region30: #{tpu_custom_call.1} parent=27 // pred_check_branch
          %158 = sbr.rel (%p156) target = $region32
        $region31: #{tpu_custom_call.1} parent=27 // pred_region
          %p159 = scmp.lt.s32.totalorder %s13, 1
          %s160 = scalar_select %p159, %s13, 1
          %s161 = smul.addr %s160, 12
          %s162 = smul.addr %s161, 8
          %s163 = scalar_lea.vmem %s0, %s162
        $region32: #{tpu_custom_call.1} parent=27 // pred_fallthru
          _
      $region28: #{tpu_custom_call.1} parent=5 // pred_fallthru
        _
      %p164 = scmp.le.s32.totalorder 1, %s13
      %p165 = scmp.lt.s32.totalorder %s13, 3
      %p166 = pnand %p164, %p165
      %p167 = pneg %p166
      // Predicated region
      $region33: #{tpu_custom_call.1} parent=5 // pred_check
        _
      $region34: #{tpu_custom_call.1} parent=5 // pred_check_branch
        %169 = sbr.rel (%p166) target = $region36
      $region35: #{tpu_custom_call.1} parent=5 // pred_region
        %s170 = ssub.s32 %s13, 1
        %p171 = scmp.lt.s32.totalorder %s18, 1
        %s172 = scalar_select %p171, %s18, 1
        %s173 = smul.addr %s172, 12
        %s174 = smul.addr %s173, 8
        %s175 = scalar_lea.vmem %s0, %s174
        %p176 = pneg %p39
        %p177 = pneg %p36
        %p178 = pneg %p60
        %p179 = pneg %p57
        %p180 = pneg %p81
        %p181 = pneg %p78
        %p182 = pneg %p102
        %p183 = pneg %p99
        %p184 = pneg %p128
        %p185 = pneg %p125
        %s186 = sand.u32 %s115, 1
        %s187 = scalar_lea.sflag [#allocation3], %s186
        %s188 = sand.u32 %s115, 1
        %s189 = smul.addr %s188, 16
        %s190 = scalar_lea.vmem [#allocation2], %s189
        %p191 = scmp.lt.s32.totalorder %s18, 1
        %s192 = scalar_select %p191, %s18, 1
        %s193 = smul.addr %s192, 12
        %s194 = smul.addr %s193, 8
        %s195 = scalar_lea.vmem %s0, %s194
        %v196 = vld [vmem:[%s1] sm:$0x7]
        %v197 = vld [vmem:[%s1 + $0x4] sm:$0x7]
        %v198 = vld [vmem:[%s1 + $0x8] sm:$0x7]
        %v199 = vld [vmem:[%s1 + $0xc] sm:$0x7]
        %v200 = vld [vmem:[%s2] sm:$0xff]
        %v201 = vld [vmem:[%s3] sm:$0xff]
        %v202 = vld [vmem:[%s3 + $0x8] sm:$0xff]
        %v203 = vld [vmem:[%s195] sm:$0xff]
        %v204 = vld [vmem:[%s195 + $0x8] sm:$0xff]
        %v205 = vld [vmem:[%s195 + $0x10] sm:$0x3]
        %v206 = vld [vmem:[%s195 + $0x18] sm:$0xff]
        %v207 = vld [vmem:[%s195 + $0x20] sm:$0xff]
        %v208 = vld [vmem:[%s195 + $0x28] sm:$0x3]
        %v209 = vld [vmem:[%s195 + $0x30] sm:$0xff]
        %v210 = vld [vmem:[%s195 + $0x38] sm:$0xff]
        %v211 = vld [vmem:[%s195 + $0x40] sm:$0x3]
        %v212 = vld [vmem:[%s195 + $0x48] sm:$0xff]
        %v213 = vld [vmem:[%s195 + $0x50] sm:$0xff]
        %v214 = vld [vmem:[%s195 + $0x58] sm:$0x3]
        %s216 = vtos %v196
        %v217 = vstv %s216
        %s220 = vtos %v197
        %v221 = vstv %s220
        %s224 = vtos %v198
        %v225 = vstv %s224
        %s228 = vtos %v199
        %v229 = vstv %s228
        %v231 = vmul.f32 %v203, %v217
        %v232 = vmul.f32 %v204, %v217
        %v233 = vmul.f32 %v206, %v221
        %v234 = vmul.f32 %v207, %v221
        %v235 = vmul.f32 %v209, %v225
        %v236 = vmul.f32 %v210, %v225
        %v237 = vmul.f32 %v212, %v229
        %v238 = vmul.f32 %v213, %v229
        %239 = vrot.lane.b32.xlu0 %v196, 127
        %v240 = vpop.permute.xlu0 %239
        %241 = vrot.lane.b32.xlu0 %v197, 127
        %v242 = vpop.permute.xlu0 %241
        %243 = vrot.lane.b32.xlu0 %v198, 127
        %v244 = vpop.permute.xlu0 %243
        %245 = vrot.lane.b32.xlu0 %v199, 127
        %v246 = vpop.permute.xlu0 %245
        %s247 = vtos %v240
        %v248 = vstv %s247
        %s250 = vtos %v242
        %v251 = vstv %s250
        %s253 = vtos %v244
        %v254 = vstv %s253
        %s256 = vtos %v246
        %v257 = vstv %s256
        %v259 = vmul.f32 %v203, %v248
        %v260 = vmul.f32 %v204, %v248
        %v261 = vmul.f32 %v206, %v251
        %v262 = vmul.f32 %v207, %v251
        %v263 = vmul.f32 %v209, %v254
        %v264 = vmul.f32 %v210, %v254
        %v265 = vmul.f32 %v212, %v257
        %v266 = vmul.f32 %v213, %v257
        %275 = vrot.lane.b32.xlu0 %v259, 127
        %v276 = vpop.permute.xlu0 %275
        %277 = vrot.lane.b32.xlu0 %v260, 127
        %v278 = vpop.permute.xlu0 %277
        %279 = vrot.lane.b32.xlu0 %v261, 127
        %v280 = vpop.permute.xlu0 %279
        %281 = vrot.lane.b32.xlu0 %v262, 127
        %v282 = vpop.permute.xlu0 %281
        %283 = vrot.lane.b32.xlu0 %v263, 127
        %v284 = vpop.permute.xlu0 %283
        %285 = vrot.lane.b32.xlu0 %v264, 127
        %v286 = vpop.permute.xlu0 %285
        %287 = vrot.lane.b32.xlu0 %v265, 127
        %v288 = vpop.permute.xlu0 %287
        %289 = vrot.lane.b32.xlu0 %v266, 127
        %v290 = vpop.permute.xlu0 %289
        %v299 = vadd.f32 %v231, %v276
        %v300 = vadd.f32 %v232, %v278
        %v301 = vadd.f32 %v233, %v280
        %v302 = vadd.f32 %v234, %v282
        %v303 = vadd.f32 %v235, %v284
        %v304 = vadd.f32 %v236, %v286
        %v305 = vadd.f32 %v237, %v288
        %v306 = vadd.f32 %v238, %v290
        %307 = vrot.lane.b32.xlu0 %v196, 126
        %v308 = vpop.permute.xlu0 %307
        %309 = vrot.lane.b32.xlu0 %v197, 126
        %v310 = vpop.permute.xlu0 %309
        %311 = vrot.lane.b32.xlu0 %v198, 126
        %v312 = vpop.permute.xlu0 %311
        %313 = vrot.lane.b32.xlu0 %v199, 126
        %v314 = vpop.permute.xlu0 %313
        %s315 = vtos %v308
        %v316 = vstv %s315
        %s318 = vtos %v310
        %v319 = vstv %s318
        %s321 = vtos %v312
        %v322 = vstv %s321
        %s324 = vtos %v314
        %v325 = vstv %s324
        %v327 = vmul.f32 %v203, %v316
        %v328 = vmul.f32 %v204, %v316
        %v329 = vmul.f32 %v206, %v319
        %v330 = vmul.f32 %v207, %v319
        %v331 = vmul.f32 %v209, %v322
        %v332 = vmul.f32 %v210, %v322
        %v333 = vmul.f32 %v212, %v325
        %v334 = vmul.f32 %v213, %v325
        %343 = vrot.lane.b32.xlu0 %v327, 126
        %v344 = vpop.permute.xlu0 %343
        %345 = vrot.lane.b32.xlu0 %v328, 126
        %v346 = vpop.permute.xlu0 %345
        %347 = vrot.lane.b32.xlu0 %v329, 126
        %v348 = vpop.permute.xlu0 %347
        %349 = vrot.lane.b32.xlu0 %v330, 126
        %v350 = vpop.permute.xlu0 %349
        %351 = vrot.lane.b32.xlu0 %v331, 126
        %v352 = vpop.permute.xlu0 %351
        %353 = vrot.lane.b32.xlu0 %v332, 126
        %v354 = vpop.permute.xlu0 %353
        %355 = vrot.lane.b32.xlu0 %v333, 126
        %v356 = vpop.permute.xlu0 %355
        %357 = vrot.lane.b32.xlu0 %v334, 126
        %v358 = vpop.permute.xlu0 %357
        %v367 = vadd.f32 %v299, %v344
        %v368 = vadd.f32 %v300, %v346
        %v369 = vadd.f32 %v301, %v348
        %v370 = vadd.f32 %v302, %v350
        %v371 = vadd.f32 %v303, %v352
        %v372 = vadd.f32 %v304, %v354
        %v373 = vadd.f32 %v305, %v356
        %v374 = vadd.f32 %v306, %v358
        %v375 = vrot.slane %v196, 1
        %v376 = vrot.slane %v197, 1
        %v377 = vrot.slane %v198, 1
        %v378 = vrot.slane %v199, 1
        %s379 = vtos %v375
        %v380 = vstv %s379
        %s382 = vtos %v376
        %v383 = vstv %s382
        %s385 = vtos %v377
        %v386 = vstv %s385
        %s388 = vtos %v378
        %v389 = vstv %s388
        %v391 = vmul.f32 %v203, %v380
        %v392 = vmul.f32 %v204, %v380
        %v393 = vmul.f32 %v205, %v380
        %v394 = vmul.f32 %v206, %v383
        %v395 = vmul.f32 %v207, %v383
        %v396 = vmul.f32 %v208, %v383
        %v397 = vmul.f32 %v209, %v386
        %v398 = vmul.f32 %v210, %v386
        %v399 = vmul.f32 %v211, %v386
        %v400 = vmul.f32 %v212, %v389
        %v401 = vmul.f32 %v213, %v389
        %v402 = vmul.f32 %v214, %v389
        %vm415 = vcmask 1046528
        %v416 = vrot.slane %v391, 1
        %v417 = vrot.slane %v392, 1
        %v418 = vsel %vm415, %v416, %v417
        %v419 = vrot.slane %v393, 1
        %v420 = vsel %vm415, %v417, %v419
        %v421 = vrot.slane %v394, 1
        %v422 = vrot.slane %v395, 1
        %v423 = vsel %vm415, %v421, %v422
        %v424 = vrot.slane %v396, 1
        %v425 = vsel %vm415, %v422, %v424
        %v426 = vrot.slane %v397, 1
        %v427 = vrot.slane %v398, 1
        %v428 = vsel %vm415, %v426, %v427
        %v429 = vrot.slane %v399, 1
        %v430 = vsel %vm415, %v427, %v429
        %v431 = vrot.slane %v400, 1
        %v432 = vrot.slane %v401, 1
        %v433 = vsel %vm415, %v431, %v432
        %v434 = vrot.slane %v402, 1
        %v435 = vsel %vm415, %v432, %v434
        %v444 = vadd.f32 %v367, %v418
        %v445 = vadd.f32 %v368, %v420
        %v446 = vadd.f32 %v369, %v423
        %v447 = vadd.f32 %v370, %v425
        %v448 = vadd.f32 %v371, %v428
        %v449 = vadd.f32 %v372, %v430
        %v450 = vadd.f32 %v373, %v433
        %v451 = vadd.f32 %v374, %v435
        %452 = vrot.lane.b32.xlu0 %v375, 127
        %v453 = vpop.permute.xlu0 %452
        %454 = vrot.lane.b32.xlu0 %v376, 127
        %v455 = vpop.permute.xlu0 %454
        %456 = vrot.lane.b32.xlu0 %v377, 127
        %v457 = vpop.permute.xlu0 %456
        %458 = vrot.lane.b32.xlu0 %v378, 127
        %v459 = vpop.permute.xlu0 %458
        %s460 = vtos %v453
        %v461 = vstv %s460
        %s463 = vtos %v455
        %v464 = vstv %s463
        %s466 = vtos %v457
        %v467 = vstv %s466
        %s469 = vtos %v459
        %v470 = vstv %s469
        %v472 = vmul.f32 %v203, %v461
        %v473 = vmul.f32 %v204, %v461
        %v474 = vmul.f32 %v205, %v461
        %v475 = vmul.f32 %v206, %v464
        %v476 = vmul.f32 %v207, %v464
        %v477 = vmul.f32 %v208, %v464
        %v478 = vmul.f32 %v209, %v467
        %v479 = vmul.f32 %v210, %v467
        %v480 = vmul.f32 %v211, %v467
        %v481 = vmul.f32 %v212, %v470
        %v482 = vmul.f32 %v213, %v470
        %v483 = vmul.f32 %v214, %v470
        %v496 = vrot.slane %v472, 1
        %v497 = vrot.slane %v473, 1
        %v498 = vsel %vm415, %v496, %v497
        %v499 = vrot.slane %v474, 1
        %v500 = vsel %vm415, %v497, %v499
        %v501 = vrot.slane %v475, 1
        %v502 = vrot.slane %v476, 1
        %v503 = vsel %vm415, %v501, %v502
        %v504 = vrot.slane %v477, 1
        %v505 = vsel %vm415, %v502, %v504
        %v506 = vrot.slane %v478, 1
        %v507 = vrot.slane %v479, 1
        %v508 = vsel %vm415, %v506, %v507
        %v509 = vrot.slane %v480, 1
        %v510 = vsel %vm415, %v507, %v509
        %v511 = vrot.slane %v481, 1
        %v512 = vrot.slane %v482, 1
        %v513 = vsel %vm415, %v511, %v512
        %v514 = vrot.slane %v483, 1
        %v515 = vsel %vm415, %v512, %v514
        %516 = vrot.lane.b32.xlu0 %v498, 127
        %v517 = vpop.permute.xlu0 %516
        %518 = vrot.lane.b32.xlu0 %v500, 127
        %v519 = vpop.permute.xlu0 %518
        %520 = vrot.lane.b32.xlu0 %v503, 127
        %v521 = vpop.permute.xlu0 %520
        %522 = vrot.lane.b32.xlu0 %v505, 127
        %v523 = vpop.permute.xlu0 %522
        %524 = vrot.lane.b32.xlu0 %v508, 127
        %v525 = vpop.permute.xlu0 %524
        %526 = vrot.lane.b32.xlu0 %v510, 127
        %v527 = vpop.permute.xlu0 %526
        %528 = vrot.lane.b32.xlu0 %v513, 127
        %v529 = vpop.permute.xlu0 %528
        %530 = vrot.lane.b32.xlu0 %v515, 127
        %v531 = vpop.permute.xlu0 %530
        %v540 = vadd.f32 %v444, %v517
        %v541 = vadd.f32 %v445, %v519
        %v542 = vadd.f32 %v446, %v521
        %v543 = vadd.f32 %v447, %v523
        %v544 = vadd.f32 %v448, %v525
        %v545 = vadd.f32 %v449, %v527
        %v546 = vadd.f32 %v450, %v529
        %v547 = vadd.f32 %v451, %v531
        %548 = vrot.lane.b32.xlu0 %v375, 126
        %v549 = vpop.permute.xlu0 %548
        %550 = vrot.lane.b32.xlu0 %v376, 126
        %v551 = vpop.permute.xlu0 %550
        %552 = vrot.lane.b32.xlu0 %v377, 126
        %v553 = vpop.permute.xlu0 %552
        %554 = vrot.lane.b32.xlu0 %v378, 126
        %v555 = vpop.permute.xlu0 %554
        %s556 = vtos %v549
        %v557 = vstv %s556
        %s559 = vtos %v551
        %v560 = vstv %s559
        %s562 = vtos %v553
        %v563 = vstv %s562
        %s565 = vtos %v555
        %v566 = vstv %s565
        %v568 = vmul.f32 %v203, %v557
        %v569 = vmul.f32 %v204, %v557
        %v570 = vmul.f32 %v205, %v557
        %v571 = vmul.f32 %v206, %v560
        %v572 = vmul.f32 %v207, %v560
        %v573 = vmul.f32 %v208, %v560
        %v574 = vmul.f32 %v209, %v563
        %v575 = vmul.f32 %v210, %v563
        %v576 = vmul.f32 %v211, %v563
        %v577 = vmul.f32 %v212, %v566
        %v578 = vmul.f32 %v213, %v566
        %v579 = vmul.f32 %v214, %v566
        %v592 = vrot.slane %v568, 1
        %v593 = vrot.slane %v569, 1
        %v594 = vsel %vm415, %v592, %v593
        %v595 = vrot.slane %v570, 1
        %v596 = vsel %vm415, %v593, %v595
        %v597 = vrot.slane %v571, 1
        %v598 = vrot.slane %v572, 1
        %v599 = vsel %vm415, %v597, %v598
        %v600 = vrot.slane %v573, 1
        %v601 = vsel %vm415, %v598, %v600
        %v602 = vrot.slane %v574, 1
        %v603 = vrot.slane %v575, 1
        %v604 = vsel %vm415, %v602, %v603
        %v605 = vrot.slane %v576, 1
        %v606 = vsel %vm415, %v603, %v605
        %v607 = vrot.slane %v577, 1
        %v608 = vrot.slane %v578, 1
        %v609 = vsel %vm415, %v607, %v608
        %v610 = vrot.slane %v579, 1
        %v611 = vsel %vm415, %v608, %v610
        %612 = vrot.lane.b32.xlu0 %v594, 126
        %v613 = vpop.permute.xlu0 %612
        %614 = vrot.lane.b32.xlu0 %v596, 126
        %v615 = vpop.permute.xlu0 %614
        %616 = vrot.lane.b32.xlu0 %v599, 126
        %v617 = vpop.permute.xlu0 %616
        %618 = vrot.lane.b32.xlu0 %v601, 126
        %v619 = vpop.permute.xlu0 %618
        %620 = vrot.lane.b32.xlu0 %v604, 126
        %v621 = vpop.permute.xlu0 %620
        %622 = vrot.lane.b32.xlu0 %v606, 126
        %v623 = vpop.permute.xlu0 %622
        %624 = vrot.lane.b32.xlu0 %v609, 126
        %v625 = vpop.permute.xlu0 %624
        %626 = vrot.lane.b32.xlu0 %v611, 126
        %v627 = vpop.permute.xlu0 %626
        %v636 = vadd.f32 %v540, %v613
        %v637 = vadd.f32 %v541, %v615
        %v638 = vadd.f32 %v542, %v617
        %v639 = vadd.f32 %v543, %v619
        %v640 = vadd.f32 %v544, %v621
        %v641 = vadd.f32 %v545, %v623
        %v642 = vadd.f32 %v546, %v625
        %v643 = vadd.f32 %v547, %v627
        %v644 = vrot.slane %v196, 2
        %v645 = vrot.slane %v197, 2
        %v646 = vrot.slane %v198, 2
        %v647 = vrot.slane %v199, 2
        %s648 = vtos %v644
        %v649 = vstv %s648
        %s651 = vtos %v645
        %v652 = vstv %s651
        %s654 = vtos %v646
        %v655 = vstv %s654
        %s657 = vtos %v647
        %v658 = vstv %s657
        %v660 = vmul.f32 %v203, %v649
        %v661 = vmul.f32 %v204, %v649
        %v662 = vmul.f32 %v205, %v649
        %v663 = vmul.f32 %v206, %v652
        %v664 = vmul.f32 %v207, %v652
        %v665 = vmul.f32 %v208, %v652
        %v666 = vmul.f32 %v209, %v655
        %v667 = vmul.f32 %v210, %v655
        %v668 = vmul.f32 %v211, %v655
        %v669 = vmul.f32 %v212, %v658
        %v670 = vmul.f32 %v213, %v658
        %v671 = vmul.f32 %v214, %v658
        %vm684 = vcmask 1045504
        %v685 = vrot.slane %v660, 2
        %v686 = vrot.slane %v661, 2
        %v687 = vsel %vm684, %v685, %v686
        %v688 = vrot.slane %v662, 2
        %v689 = vsel %vm684, %v686, %v688
        %v690 = vrot.slane %v663, 2
        %v691 = vrot.slane %v664, 2
        %v692 = vsel %vm684, %v690, %v691
        %v693 = vrot.slane %v665, 2
        %v694 = vsel %vm684, %v691, %v693
        %v695 = vrot.slane %v666, 2
        %v696 = vrot.slane %v667, 2
        %v697 = vsel %vm684, %v695, %v696
        %v698 = vrot.slane %v668, 2
        %v699 = vsel %vm684, %v696, %v698
        %v700 = vrot.slane %v669, 2
        %v701 = vrot.slane %v670, 2
        %v702 = vsel %vm684, %v700, %v701
        %v703 = vrot.slane %v671, 2
        %v704 = vsel %vm684, %v701, %v703
        %v713 = vadd.f32 %v636, %v687
        %v714 = vadd.f32 %v637, %v689
        %v715 = vadd.f32 %v638, %v692
        %v716 = vadd.f32 %v639, %v694
        %v717 = vadd.f32 %v640, %v697
        %v718 = vadd.f32 %v641, %v699
        %v719 = vadd.f32 %v642, %v702
        %v720 = vadd.f32 %v643, %v704
        %721 = vrot.lane.b32.xlu0 %v644, 127
        %v722 = vpop.permute.xlu0 %721
        %723 = vrot.lane.b32.xlu0 %v645, 127
        %v724 = vpop.permute.xlu0 %723
        %725 = vrot.lane.b32.xlu0 %v646, 127
        %v726 = vpop.permute.xlu0 %725
        %727 = vrot.lane.b32.xlu0 %v647, 127
        %v728 = vpop.permute.xlu0 %727
        %s729 = vtos %v722
        %v730 = vstv %s729
        %s732 = vtos %v724
        %v733 = vstv %s732
        %s735 = vtos %v726
        %v736 = vstv %s735
        %s738 = vtos %v728
        %v739 = vstv %s738
        %v741 = vmul.f32 %v203, %v730
        %v742 = vmul.f32 %v204, %v730
        %v743 = vmul.f32 %v205, %v730
        %v744 = vmul.f32 %v206, %v733
        %v745 = vmul.f32 %v207, %v733
        %v746 = vmul.f32 %v208, %v733
        %v747 = vmul.f32 %v209, %v736
        %v748 = vmul.f32 %v210, %v736
        %v749 = vmul.f32 %v211, %v736
        %v750 = vmul.f32 %v212, %v739
        %v751 = vmul.f32 %v213, %v739
        %v752 = vmul.f32 %v214, %v739
        %v765 = vrot.slane %v741, 2
        %v766 = vrot.slane %v742, 2
        %v767 = vsel %vm684, %v765, %v766
        %v768 = vrot.slane %v743, 2
        %v769 = vsel %vm684, %v766, %v768
        %v770 = vrot.slane %v744, 2
        %v771 = vrot.slane %v745, 2
        %v772 = vsel %vm684, %v770, %v771
        %v773 = vrot.slane %v746, 2
        %v774 = vsel %vm684, %v771, %v773
        %v775 = vrot.slane %v747, 2
        %v776 = vrot.slane %v748, 2
        %v777 = vsel %vm684, %v775, %v776
        %v778 = vrot.slane %v749, 2
        %v779 = vsel %vm684, %v776, %v778
        %v780 = vrot.slane %v750, 2
        %v781 = vrot.slane %v751, 2
        %v782 = vsel %vm684, %v780, %v781
        %v783 = vrot.slane %v752, 2
        %v784 = vsel %vm684, %v781, %v783
        %785 = vrot.lane.b32.xlu0 %v767, 127
        %v786 = vpop.permute.xlu0 %785
        %787 = vrot.lane.b32.xlu0 %v769, 127
        %v788 = vpop.permute.xlu0 %787
        %789 = vrot.lane.b32.xlu0 %v772, 127
        %v790 = vpop.permute.xlu0 %789
        %791 = vrot.lane.b32.xlu0 %v774, 127
        %v792 = vpop.permute.xlu0 %791
        %793 = vrot.lane.b32.xlu0 %v777, 127
        %v794 = vpop.permute.xlu0 %793
        %795 = vrot.lane.b32.xlu0 %v779, 127
        %v796 = vpop.permute.xlu0 %795
        %797 = vrot.lane.b32.xlu0 %v782, 127
        %v798 = vpop.permute.xlu0 %797
        %799 = vrot.lane.b32.xlu0 %v784, 127
        %v800 = vpop.permute.xlu0 %799
        %v809 = vadd.f32 %v713, %v786
        %v810 = vadd.f32 %v714, %v788
        %v811 = vadd.f32 %v715, %v790
        %v812 = vadd.f32 %v716, %v792
        %v813 = vadd.f32 %v717, %v794
        %v814 = vadd.f32 %v718, %v796
        %v815 = vadd.f32 %v719, %v798
        %v816 = vadd.f32 %v720, %v800
        %817 = vrot.lane.b32.xlu0 %v644, 126
        %v818 = vpop.permute.xlu0 %817
        %819 = vrot.lane.b32.xlu0 %v645, 126
        %v820 = vpop.permute.xlu0 %819
        %821 = vrot.lane.b32.xlu0 %v646, 126
        %v822 = vpop.permute.xlu0 %821
        %823 = vrot.lane.b32.xlu0 %v647, 126
        %v824 = vpop.permute.xlu0 %823
        %s825 = vtos %v818
        %v826 = vstv %s825
        %s828 = vtos %v820
        %v829 = vstv %s828
        %s831 = vtos %v822
        %v832 = vstv %s831
        %s834 = vtos %v824
        %v835 = vstv %s834
        %v837 = vmul.f32 %v203, %v826
        %v838 = vmul.f32 %v204, %v826
        %v839 = vmul.f32 %v205, %v826
        %v840 = vmul.f32 %v206, %v829
        %v841 = vmul.f32 %v207, %v829
        %v842 = vmul.f32 %v208, %v829
        %v843 = vmul.f32 %v209, %v832
        %v844 = vmul.f32 %v210, %v832
        %v845 = vmul.f32 %v211, %v832
        %v846 = vmul.f32 %v212, %v835
        %v847 = vmul.f32 %v213, %v835
        %v848 = vmul.f32 %v214, %v835
        %v861 = vrot.slane %v837, 2
        %v862 = vrot.slane %v838, 2
        %v863 = vsel %vm684, %v861, %v862
        %v864 = vrot.slane %v839, 2
        %v865 = vsel %vm684, %v862, %v864
        %v866 = vrot.slane %v840, 2
        %v867 = vrot.slane %v841, 2
        %v868 = vsel %vm684, %v866, %v867
        %v869 = vrot.slane %v842, 2
        %v870 = vsel %vm684, %v867, %v869
        %v871 = vrot.slane %v843, 2
        %v872 = vrot.slane %v844, 2
        %v873 = vsel %vm684, %v871, %v872
        %v874 = vrot.slane %v845, 2
        %v875 = vsel %vm684, %v872, %v874
        %v876 = vrot.slane %v846, 2
        %v877 = vrot.slane %v847, 2
        %v878 = vsel %vm684, %v876, %v877
        %v879 = vrot.slane %v848, 2
        %v880 = vsel %vm684, %v877, %v879
        %881 = vrot.lane.b32.xlu0 %v863, 126
        %v882 = vpop.permute.xlu0 %881
        %883 = vrot.lane.b32.xlu0 %v865, 126
        %v884 = vpop.permute.xlu0 %883
        %885 = vrot.lane.b32.xlu0 %v868, 126
        %v886 = vpop.permute.xlu0 %885
        %887 = vrot.lane.b32.xlu0 %v870, 126
        %v888 = vpop.permute.xlu0 %887
        %889 = vrot.lane.b32.xlu0 %v873, 126
        %v890 = vpop.permute.xlu0 %889
        %891 = vrot.lane.b32.xlu0 %v875, 126
        %v892 = vpop.permute.xlu0 %891
        %893 = vrot.lane.b32.xlu0 %v878, 126
        %v894 = vpop.permute.xlu0 %893
        %895 = vrot.lane.b32.xlu0 %v880, 126
        %v896 = vpop.permute.xlu0 %895
        %v905 = vadd.f32 %v809, %v882
        %v906 = vadd.f32 %v810, %v884
        %v907 = vadd.f32 %v811, %v886
        %v908 = vadd.f32 %v812, %v888
        %v909 = vadd.f32 %v813, %v890
        %v910 = vadd.f32 %v814, %v892
        %v911 = vadd.f32 %v815, %v894
        %v912 = vadd.f32 %v816, %v896
        %v913 = vcombine.low %v905, %v909
        %v914 = vcombine.high %v905, %v909
        %v916 = vunpack.c.l.s4 1983009808
        %v917 = vunpack.c.0.s8 %v916
        %v918 = vlaneseq
        %v919 = vshrl.u32 %v918, 7
        %v920 = vsub.s32 %v917, %v919
        %v921 = vrot.slane %v913, %v920
        %v923 = vunpack.c.l.s4 1983009808
        %v924 = vunpack.c.0.s8 %v923
        %v925 = vlaneseq
        %v926 = vshrl.u32 %v925, 7
        %v927 = vsub.s32 %v924, %v926
        %v928 = vrot.slane %v914, %v927
        %v929 = vcombine.low %v907, %v911
        %v930 = vcombine.high %v907, %v911
        %v932 = vunpack.c.l.s4 1983009808
        %v933 = vunpack.c.0.s8 %v932
        %v934 = vlaneseq
        %v935 = vshrl.u32 %v934, 7
        %v936 = vsub.s32 %v933, %v935
        %v937 = vrot.slane %v929, %v936
        %v939 = vunpack.c.l.s4 1983009808
        %v940 = vunpack.c.0.s8 %v939
        %v941 = vlaneseq
        %v942 = vshrl.u32 %v941, 7
        %v943 = vsub.s32 %v940, %v942
        %v944 = vrot.slane %v930, %v943
        %v945 = vcombine.low %v921, %v937
        %v946 = vcombine.high %v921, %v937
        %v948 = vunpack.c.l.s4 1934713408
        %v949 = vunpack.c.0.s8 %v948
        %v950 = vlaneseq
        %v951 = vshrl.u32 %v950, 7
        %v952 = vsub.s32 %v949, %v951
        %v953 = vrot.slane %v945, %v952
        %v955 = vunpack.c.l.s4 1934713408
        %v956 = vunpack.c.0.s8 %v955
        %v957 = vlaneseq
        %v958 = vshrl.u32 %v957, 7
        %v959 = vsub.s32 %v956, %v958
        %v960 = vrot.slane %v946, %v959
        %v961 = vcombine.low %v928, %v944
        %v962 = vcombine.high %v928, %v944
        %v964 = vunpack.c.l.s4 1934713408
        %v965 = vunpack.c.0.s8 %v964
        %v966 = vlaneseq
        %v967 = vshrl.u32 %v966, 7
        %v968 = vsub.s32 %v965, %v967
        %v969 = vrot.slane %v961, %v968
        %v971 = vunpack.c.l.s4 1934713408
        %v972 = vunpack.c.0.s8 %v971
        %v973 = vlaneseq
        %v974 = vshrl.u32 %v973, 7
        %v975 = vsub.s32 %v972, %v974
        %v976 = vrot.slane %v962, %v975
        %v977 = vcombine.high %v953, 0.0
        %v978 = vcombine.high %v960, 0.0
        %v979 = vcombine.high %v969, 0.0
        %v980 = vcombine.high %v976, 0.0
        %v981 = vcombine.low %v906, %v910
        %v982 = vcombine.high %v906, %v910
        %v984 = vunpack.c.l.s4 1983009808
        %v985 = vunpack.c.0.s8 %v984
        %v986 = vlaneseq
        %v987 = vshrl.u32 %v986, 7
        %v988 = vsub.s32 %v985, %v987
        %v989 = vrot.slane %v981, %v988
        %v991 = vunpack.c.l.s4 1983009808
        %v992 = vunpack.c.0.s8 %v991
        %v993 = vlaneseq
        %v994 = vshrl.u32 %v993, 7
        %v995 = vsub.s32 %v992, %v994
        %v996 = vrot.slane %v982, %v995
        %v997 = vcombine.low %v908, %v912
        %v998 = vcombine.high %v908, %v912
        %v1000 = vunpack.c.l.s4 1983009808
        %v1001 = vunpack.c.0.s8 %v1000
        %v1002 = vlaneseq
        %v1003 = vshrl.u32 %v1002, 7
        %v1004 = vsub.s32 %v1001, %v1003
        %v1005 = vrot.slane %v997, %v1004
        %v1007 = vunpack.c.l.s4 1983009808
        %v1008 = vunpack.c.0.s8 %v1007
        %v1009 = vlaneseq
        %v1010 = vshrl.u32 %v1009, 7
        %v1011 = vsub.s32 %v1008, %v1010
        %v1012 = vrot.slane %v998, %v1011
        %v1013 = vcombine.low %v989, %v1005
        %v1014 = vcombine.high %v989, %v1005
        %v1016 = vunpack.c.l.s4 1934713408
        %v1017 = vunpack.c.0.s8 %v1016
        %v1018 = vlaneseq
        %v1019 = vshrl.u32 %v1018, 7
        %v1020 = vsub.s32 %v1017, %v1019
        %v1021 = vrot.slane %v1013, %v1020
        %v1023 = vunpack.c.l.s4 1934713408
        %v1024 = vunpack.c.0.s8 %v1023
        %v1025 = vlaneseq
        %v1026 = vshrl.u32 %v1025, 7
        %v1027 = vsub.s32 %v1024, %v1026
        %v1028 = vrot.slane %v1014, %v1027
        %v1029 = vcombine.low %v996, %v1012
        %v1030 = vcombine.high %v996, %v1012
        %v1032 = vunpack.c.l.s4 1934713408
        %v1033 = vunpack.c.0.s8 %v1032
        %v1034 = vlaneseq
        %v1035 = vshrl.u32 %v1034, 7
        %v1036 = vsub.s32 %v1033, %v1035
        %v1037 = vrot.slane %v1029, %v1036
        %v1039 = vunpack.c.l.s4 1934713408
        %v1040 = vunpack.c.0.s8 %v1039
        %v1041 = vlaneseq
        %v1042 = vshrl.u32 %v1041, 7
        %v1043 = vsub.s32 %v1040, %v1042
        %v1044 = vrot.slane %v1030, %v1043
        %v1045 = vcombine.high %v1021, 0.0
        %v1046 = vcombine.high %v1028, 0.0
        %v1047 = vcombine.high %v1037, 0.0
        %v1048 = vcombine.high %v1044, 0.0
        %1050 = vrot.lane.b32.xlu0 %v977, 16
        %v1051 = vpop.permute.xlu0 %1050
        %1054 = vrot.lane.b32.xlu0 %v960, 32
        %v1055 = vpop.permute.xlu0 %1054
        %1058 = vrot.lane.b32.xlu0 %v978, 48
        %v1059 = vpop.permute.xlu0 %1058
        %1062 = vrot.lane.b32.xlu0 %v969, 64
        %v1063 = vpop.permute.xlu0 %1062
        %1066 = vrot.lane.b32.xlu0 %v979, 80
        %v1067 = vpop.permute.xlu0 %1066
        %1070 = vrot.lane.b32.xlu0 %v976, 96
        %v1071 = vpop.permute.xlu0 %1070
        %1074 = vrot.lane.b32.xlu0 %v980, 112
        %v1075 = vpop.permute.xlu0 %1074
        %1078 = vrot.lane.b32.xlu0 %v1045, 16
        %v1079 = vpop.permute.xlu0 %1078
        %1082 = vrot.lane.b32.xlu0 %v1028, 32
        %v1083 = vpop.permute.xlu0 %1082
        %1086 = vrot.lane.b32.xlu0 %v1046, 48
        %v1087 = vpop.permute.xlu0 %1086
        %1090 = vrot.lane.b32.xlu0 %v1037, 64
        %v1091 = vpop.permute.xlu0 %1090
        %1094 = vrot.lane.b32.xlu0 %v1047, 80
        %v1095 = vpop.permute.xlu0 %1094
        %1098 = vrot.lane.b32.xlu0 %v1044, 96
        %v1099 = vpop.permute.xlu0 %1098
        %1102 = vrot.lane.b32.xlu0 %v1048, 112
        %v1103 = vpop.permute.xlu0 %1102
        %vm1105 = vcmask 130048
        %v1106 = vsel %vm1105, %v953, %v1051
        %vm1107 = vcmask 261120
        %v1108 = vsel %vm1107, %v1106, %v1055
        %vm1109 = vcmask 392192
        %v1110 = vsel %vm1109, %v1108, %v1059
        %vm1111 = vcmask 523264
        %v1112 = vsel %vm1111, %v1110, %v1063
        %vm1113 = vcmask 654336
        %v1114 = vsel %vm1113, %v1112, %v1067
        %vm1115 = vcmask 785408
        %v1116 = vsel %vm1115, %v1114, %v1071
        %vm1117 = vcmask 916480
        %v1118 = vsel %vm1117, %v1116, %v1075
        %v1119 = vsel %vm1105, %v1021, %v1079
        %v1120 = vsel %vm1107, %v1119, %v1083
        %v1121 = vsel %vm1109, %v1120, %v1087
        %v1122 = vsel %vm1111, %v1121, %v1091
        %v1123 = vsel %vm1113, %v1122, %v1095
        %v1124 = vsel %vm1115, %v1123, %v1099
        %v1125 = vsel %vm1117, %v1124, %v1103
        %1127 = vset.pattern.permute.xlu0 0
        %1128 = vperm.xlu0 %1127, %v200
        %v1129 = vpop.permute.xlu0 %1128
        %v1131 = vlaneseq
        %v1132 = vshrl.u32 %v1131, 7
        %v1133 = vsub.s32 0, %v1132
        %v1134 = vrot.slane %v1118, %v1133
        %v1135 = vlaneseq
        %v1136 = vshrl.u32 %v1135, 7
        %v1137 = vsub.s32 0, %v1136
        %v1138 = vrot.slane %v1125, %v1137
        %v1139 = vmul.f32 %v1129, %v1134
        %v1140 = vmul.f32 %v1129, %v1138
        %v1141 = vadd.f32 %v201, %v1139
        %v1142 = vadd.f32 %v202, %v1140
        %1143 = vset.pattern.permute.xlu0 1
        %1144 = vperm.xlu0 %1143, %v200
        %v1145 = vpop.permute.xlu0 %1144
        %v1147 = vlaneseq
        %v1148 = vshrl.u32 %v1147, 7
        %v1149 = vsub.s32 1, %v1148
        %v1150 = vrot.slane %v1118, %v1149
        %v1151 = vlaneseq
        %v1152 = vshrl.u32 %v1151, 7
        %v1153 = vsub.s32 1, %v1152
        %v1154 = vrot.slane %v1125, %v1153
        %v1155 = vmul.f32 %v1145, %v1150
        %v1156 = vmul.f32 %v1145, %v1154
        %v1157 = vadd.f32 %v1141, %v1155
        %v1158 = vadd.f32 %v1142, %v1156
        %1159 = vset.pattern.permute.xlu0 2
        %1160 = vperm.xlu0 %1159, %v200
        %v1161 = vpop.permute.xlu0 %1160
        %v1163 = vlaneseq
        %v1164 = vshrl.u32 %v1163, 7
        %v1165 = vsub.s32 2, %v1164
        %v1166 = vrot.slane %v1118, %v1165
        %v1167 = vlaneseq
        %v1168 = vshrl.u32 %v1167, 7
        %v1169 = vsub.s32 2, %v1168
        %v1170 = vrot.slane %v1125, %v1169
        %v1171 = vmul.f32 %v1161, %v1166
        %v1172 = vmul.f32 %v1161, %v1170
        %v1173 = vadd.f32 %v1157, %v1171
        %v1174 = vadd.f32 %v1158, %v1172
        %1175 = vset.pattern.permute.xlu0 3
        %1176 = vperm.xlu0 %1175, %v200
        %v1177 = vpop.permute.xlu0 %1176
        %v1179 = vlaneseq
        %v1180 = vshrl.u32 %v1179, 7
        %v1181 = vsub.s32 3, %v1180
        %v1182 = vrot.slane %v1118, %v1181
        %v1183 = vlaneseq
        %v1184 = vshrl.u32 %v1183, 7
        %v1185 = vsub.s32 3, %v1184
        %v1186 = vrot.slane %v1125, %v1185
        %v1187 = vmul.f32 %v1177, %v1182
        %v1188 = vmul.f32 %v1177, %v1186
        %v1189 = vadd.f32 %v1173, %v1187
        %v1190 = vadd.f32 %v1174, %v1188
        %1191 = vst [vmem:[%s190] sm:$0xff] %v1189
        %1192 = vst [vmem:[%s190 + $0x8] sm:$0xff] %v1190
        %s1193 = sand.u32 %s115, 1
        %s1194 = scalar_lea.sflag [#allocation3], %s1193
        %s1195 = sand.u32 %s115, 1
        %s1196 = smul.addr %s1195, 16
        %s1197 = scalar_lea.vmem [#allocation2], %s1196
        // Predicated region
        $region37: #{tpu_custom_call.1} parent=35 // pred_check
          %p1198 = pneg %p125
        $region38: #{tpu_custom_call.1} parent=35 // pred_check_branch
          %1200 = sbr.rel (%p1198) target = $region40
        $region39: #{tpu_custom_call.1} parent=35 // pred_region
          %s1202 = ssub.s32 256, 256
          %1203 = vsyncadd %s1194, %s1202
          %s1204 = smul.addr %s18, 2
          %s1205 = smul.addr %s1204, 128
          %s1206 = scalar_lea.hbm %s4, %s1205
          %s1208 = sshll.u32 %s1197, 4
          %s1209 = int_to_ptr.vmem [resolvable:$true] %s1208
          %1211 = dma.vmem_to_hbm [thread:$0]  %s1209, 256, %s1206, %s1194
        $region40: #{tpu_custom_call.1} parent=35 // pred_fallthru
          _
      $region36: #{tpu_custom_call.1} parent=5 // pred_fallthru
        _
      %p1212 = scmp.le.s32.totalorder 2, %s13
      // Predicated region
      $region41: #{tpu_custom_call.1} parent=5 // pred_check
        %p1213 = pneg %p1212
      $region42: #{tpu_custom_call.1} parent=5 // pred_check_branch
        %1215 = sbr.rel (%p1213) target = $region44
      $region43: #{tpu_custom_call.1} parent=5 // pred_region
        %s1216 = ssub.s32 %s13, 2
        // Predicated region
        $region45: #{tpu_custom_call.1} parent=43 // pred_check
          %p1217 = pneg %p131
        $region46: #{tpu_custom_call.1} parent=43 // pred_check_branch
          %1219 = sbr.rel (%p1217) target = $region48
        $region47: #{tpu_custom_call.1} parent=43 // pred_region
          %s1220 = sand.u32 %s116, 1
          %s1221 = scalar_lea.sflag [#allocation3], %s1220
          %s1222 = sand.u32 %s116, 1
          %s1223 = smul.addr %s1222, 16
          %s1224 = scalar_lea.vmem [#allocation2], %s1223
          %1225 = dma.done %s1221, 256
        $region48: #{tpu_custom_call.1} parent=43 // pred_fallthru
          _
      $region44: #{tpu_custom_call.1} parent=5 // pred_fallthru
        _
    $region6: #{tpu_custom_call.1} parent=1 // loop_footer
      %s17 = sadd.s32 1, %s13
    $region7: #{tpu_custom_call.1} parent=1 // loop_footer_branch
      %12 = sbr.rel target = $region3
    $region8: #{tpu_custom_call.1} parent=1 // loop_exit
      _
    %1226 = vsyncpa [#allocation3], 1
    %s1227 = scalar_lea.sflag [#allocation3], 1
    %1228 = vsyncpa %s1227, 1

</llo_original>
